<compile_context>
chip_gen: v7x
topology: tpu7x:2x2x1
jax: 0.10.0
libtpu: 0.0.40
codegen_flags: <defaults>
</compile_context>

<pallas_src>
import jax
import jax.numpy as jnp
from jax import lax
from jax.experimental import pallas as pl
from jax.experimental.pallas import tpu as pltpu


_BIG = 1e30  # "in tree" sentinel for Prim's (plain Python float -> literal, never a captured const)


def _vmem_limit_bytes(needed):
    """Generation-aware VMEM limit: physical capacity minus headroom, at least the default 32 MiB."""
    try:
        cap = int(pltpu.get_tpu_info().vmem_capacity_bytes)   # 64 MiB on v7x, 128 MiB on v5e/v6e
    except Exception:
        cap = 64 * 1024 * 1024
    budget = max(cap - 8 * 1024 * 1024, 16 * 1024 * 1024)
    return int(min(budget, max(32 * 1024 * 1024, needed)))


# ----------------------------------------------------------------------------
# Fused kernel: pairwise distances (MXU) -> interleaved Prim MSTs -> signature loss
# ----------------------------------------------------------------------------
def _topo_loss_kernel(x_ref, z_ref, o_ref, dx_ref, dz_ref):
    n = dx_ref.shape[0]
    iota_f = lax.broadcasted_iota(jnp.int32, (1, n), 1).astype(jnp.float32)

    def dist_into(p_ref, d_ref):
        a = p_ref[...].astype(jnp.float32)
        # NOTE: gram kept in f32 (not bf16): cancellation on near-duplicate points would perturb
        # the MST edge ordering, and this kernel is latency/serial-loop bound, not MXU bound.
        sa = jnp.sum(a * a, axis=-1, keepdims=True)                      # (n, 1)
        gram = lax.dot_general(a, a, (((1,), (1,)), ((), ())),
                               preferred_element_type=jnp.float32)       # (n, n) -> MXU
        d = jnp.sqrt(jnp.maximum(sa + jnp.transpose(sa) - 2.0 * gram, 0.0))
        d_ref[...] = d
        # global max (two-stage reduce, stays 2-D)
        return jnp.max(jnp.max(d, axis=1, keepdims=True), axis=0, keepdims=True)   # (1, 1)

    mx = dist_into(x_ref, dx_ref)
    mz = dist_into(z_ref, dz_ref)
    inv_mx = 1.0 / jnp.maximum(mx, 1e-30)
    inv_mz = 1.0 / jnp.maximum(mz, 1e-30)

    def chain_init(da_ref, db_ref):
        # Start Prim's from node 0: frontier dists = da[0, :], corresponding other-matrix values
        # min_b[w] = db[parent(w)=0, w].  Node 0 itself marked "in tree" with the sentinel.
        min_a = jnp.where(iota_f == 0.0, _BIG, da_ref[pl.ds(0, 1), :])   # (1, n)
        min_b = db_ref[pl.ds(0, 1), :]                                   # (1, n)
        return min_a, min_b, jnp.zeros((1, 1), jnp.float32)

    def chain_step(da_ref, db_ref, inv_a, inv_b, min_a, min_b, acc):
        # Pick the cheapest frontier edge (u, v): weight m in da, and db[u, v] is carried in min_b.
        m = jnp.min(min_a, axis=1, keepdims=True)                        # (1, 1) edge weight in da
        v_f = jnp.min(jnp.where(min_a == m, iota_f, float(n)),
                      axis=1, keepdims=True)                             # (1, 1) new tree node (ties -> min idx)
        sel = iota_f == v_f
        b_val = jnp.sum(jnp.where(sel, min_b, 0.0), axis=1, keepdims=True)   # (1, 1) db[parent(v), v]
        diff = m * inv_a - b_val * inv_b
        acc = acc + diff * diff
        # Add v to the tree and relax the frontier (both matrices' rows with the same mask).
        v_idx = v_f[0, 0].astype(jnp.int32)
        min_a = jnp.where(sel, _BIG, min_a)
        dv_a = da_ref[pl.ds(v_idx, 1), :]                                # (1, n)
        dv_b = db_ref[pl.ds(v_idx, 1), :]                                # (1, n)
        better = (dv_a < min_a) & (min_a < _BIG)
        min_a = jnp.where(better, dv_a, min_a)
        min_b = jnp.where(better, dv_b, min_b)
        return min_a, min_b, acc

    cx = chain_init(dx_ref, dz_ref)   # pairing pi_X: Prim on D_X, carry D_Z[parent, w]
    cz = chain_init(dz_ref, dx_ref)   # pairing pi_Z: Prim on D_Z, carry D_X[parent, w]

    def body(_, carry):
        state_x, state_z = carry
        # Two independent serial chains in the same iteration -> latency chains overlap.
        state_x = chain_step(dx_ref, dz_ref, inv_mx, inv_mz, *state_x)
        state_z = chain_step(dz_ref, dx_ref, inv_mz, inv_mx, *state_z)
        return state_x, state_z

    (_, _, acc_x), (_, _, acc_z) = lax.fori_loop(0, n - 1, body, (cx, cz))
    o_ref[...] = 0.5 * (acc_x + acc_z)

    # TODO(synk): for very large N (loop becomes throughput-limited) reshape the (1, N) frontier
    # state to (8, N/8) so relax/select passes use full 8-sublane vregs.


# ----------------------------------------------------------------------------
# Full forward (== TopologicalAutoencoderLoss.forward)
# ----------------------------------------------------------------------------
def topological_autoencoder_loss(x, z):
    x = x.astype(jnp.float32)
    z = z.astype(jnp.float32)
    n = x.shape[0]
    assert z.shape[0] == n and n >= 2
    assert n < (1 << 24)  # indices carried as f32 in-kernel must be exact
    xf = x.reshape(n, -1)
    zf = z.reshape(n, -1)
    # Centering is translation-invariant for pairwise distances but improves the conditioning of
    # the ||a||^2 + ||b||^2 - 2ab gram trick (stabler MST edge ordering).
    xf = xf - jnp.mean(xf, axis=0, keepdims=True)
    zf = zf - jnp.mean(zf, axis=0, keepdims=True)
    dxd = xf.shape[1]
    dzd = zf.shape[1]

    needed = 2 * n * n * 4 + 4 * n * (dxd + dzd) * 2 + (1 << 20)
    vmem_limit = _vmem_limit_bytes(needed)
    # TODO(synk): for N where 2*N^2*4 B exceeds the per-chip VMEM budget (~N > 2600 on v7x,
    # ~N > 3800 on v5e/v6e), keep the point clouds in pl.ANY and stream distance-matrix rows
    # with make_async_copy instead of full VMEM-resident scratch.

    out = pl.pallas_call(
        _topo_loss_kernel,
        out_shape=jax.ShapeDtypeStruct((1, 1), jnp.float32),
        grid=(1,),
        in_specs=[
            pl.BlockSpec((n, dxd), lambda i: (0, 0)),
            pl.BlockSpec((n, dzd), lambda i: (0, 0)),
        ],
        out_specs=pl.BlockSpec((1, 1), lambda i: (0, 0)),
        scratch_shapes=[
            pltpu.VMEM((n, n), jnp.float32),   # D_X
            pltpu.VMEM((n, n), jnp.float32),   # D_Z
        ],
        compiler_params=pltpu.CompilerParams(
            dimension_semantics=("arbitrary",),
            vmem_limit_bytes=vmem_limit,
        ),
    )(xf, zf)
    return out[0, 0]


# ----------------------------------------------------------------------------
# Pure-JAX reference of the same math (sanity check only)
# ----------------------------------------------------------------------------
def _mst_edges(dist):
    n = dist.shape[0]
    big = jnp.float32(jnp.inf)
    in_tree = jnp.zeros((n,), dtype=bool).at[0].set(True)
    min_dist = dist[0, :]
    parent = jnp.zeros((n,), dtype=jnp.int32)
    edges_u = jnp.zeros((n - 1,), dtype=jnp.int32)
    edges_v = jnp.zeros((n - 1,), dtype=jnp.int32)

    def body(i, carry):
        in_tree, min_dist, parent, edges_u, edges_v = carry
        masked = jnp.where(in_tree, big, min_dist)
        j = jnp.argmin(masked).astype(jnp.int32)
        u = parent[j]
        edges_u = edges_u.at[i].set(u)
        edges_v = edges_v.at[i].set(j)
        in_tree = in_tree.at[j].set(True)
        dj = dist[j, :]
        better = (dj < min_dist) & (~in_tree)
        parent = jnp.where(better, j, parent)
        min_dist = jnp.where(better, dj, min_dist)
        return in_tree, min_dist, parent, edges_u, edges_v

    carry = (in_tree, min_dist, parent, edges_u, edges_v)
    carry = lax.fori_loop(0, n - 1, body, carry)
    return carry[3], carry[4]


def _reference_loss(x, z):
    def cdist(a):
        d2 = jnp.sum((a[:, None, :] - a[None, :, :]) ** 2, axis=-1)
        return jnp.sqrt(jnp.maximum(d2, 0.0))

    n = x.shape[0]
    dx = cdist(x.astype(jnp.float32).reshape(n, -1))
    dz = cdist(z.astype(jnp.float32).reshape(n, -1))
    dxn = dx / jnp.max(dx)
    dzn = dz / jnp.max(dz)
    eux, evx = _mst_edges(dx)
    euz, evz = _mst_edges(dz)
    lx = jnp.sum((dxn[eux, evx] - dzn[eux, evx]) ** 2)
    lz = jnp.sum((dxn[euz, evz] - dzn[euz, evz]) ** 2)
    return 0.5 * (lx + lz)


if __name__ == "__main__":
    key = jax.random.PRNGKey(0)
    kx, kz = jax.random.split(key)
    # N = 16 points; data dim 64, latent dim 8.
    x = jax.random.normal(kx, (16, 64), dtype=jnp.float32)
    z = jax.random.normal(kz, (16, 8), dtype=jnp.float32)

    loss = jax.block_until_ready(jax.jit(topological_autoencoder_loss)(x, z))
    ref = jax.block_until_ready(jax.jit(_reference_loss)(x, z))

    assert jnp.isfinite(loss), "non-finite loss"
    assert jnp.allclose(loss, ref, rtol=1e-3, atol=1e-4), (loss, ref)

    print("KERNEL_OK")
</pallas_src>

<mosaic_0001>
module attributes {stable_mosaic.version = 11 : i64} {
  func.func @_topo_loss_kernel(%arg0: i32, %arg1: memref<16x64xf32, #tpu.memory_space<vmem>>, %arg2: memref<16x8xf32, #tpu.memory_space<vmem>>, %arg3: memref<1x1xf32, #tpu.memory_space<vmem>>, %arg4: memref<16x16xf32, #tpu.memory_space<vmem>>, %arg5: memref<16x16xf32, #tpu.memory_space<vmem>>) attributes {dimension_semantics = [#tpu.dimension_semantics<arbitrary>], iteration_bounds = array<i64: 1>, scalar_prefetch = 0 : i64, scratch_operands = 2 : i64, tpu.core_type = #tpu.core_type<tc>, window_params = [{pipeline_mode = #tpu.pipeline_mode<synchronous>, transform_indices = @transform_0, window_bounds = array<i64: 16, 64>}, {pipeline_mode = #tpu.pipeline_mode<synchronous>, transform_indices = @transform_1, window_bounds = array<i64: 16, 8>}, {pipeline_mode = #tpu.pipeline_mode<synchronous>, transform_indices = @transform_2, window_bounds = array<i64: 1, 1>}]} {
    %0 = tpu.iota {dimensions = array<i32: 1>} : vector<1x16xi32>
    %1 = arith.sitofp %0 : vector<1x16xi32> to vector<1x16xf32>
    %c0 = arith.constant 0 : index
    %c0_0 = arith.constant 0 : index
    %2 = vector.load %arg1[%c0, %c0_0] : memref<16x64xf32, #tpu.memory_space<vmem>>, vector<16x64xf32>
    %3 = arith.mulf %2, %2 : vector<16x64xf32>
    %cst = arith.constant dense<0.000000e+00> : vector<16xf32>
    %4 = vector.multi_reduction <add>, %3, %cst [1] : vector<16x64xf32> to vector<16xf32>
    %5 = vector.shape_cast %4 : vector<16xf32> to vector<16x1xf32>
    %cst_1 = arith.constant dense<0.000000e+00> : vector<16x16xf32>
    %6 = tpu.matmul %2, %2, %cst_1 {dimension_numbers = #tpu.dot_dimension_numbers<[1], [1], [0], [0], [0, 0, 1, 0], [], []>} : vector<16x64xf32>, vector<16x64xf32>, vector<16x16xf32> -> vector<16x16xf32>
    %7 = tpu.transpose %5, [1, 0] : vector<16x1xf32> -> vector<1x16xf32>
    %8 = vector.broadcast %5 : vector<16x1xf32> to vector<16x16xf32>
    %9 = vector.broadcast %7 : vector<1x16xf32> to vector<16x16xf32>
    %10 = arith.addf %8, %9 : vector<16x16xf32>
    %cst_2 = arith.constant 2.000000e+00 : f32
    %11 = vector.broadcast %cst_2 : f32 to vector<16x16xf32>
    %12 = arith.mulf %11, %6 : vector<16x16xf32>
    %13 = arith.subf %10, %12 : vector<16x16xf32>
    %cst_3 = arith.constant 0.000000e+00 : f32
    %14 = vector.broadcast %cst_3 : f32 to vector<16x16xf32>
    %15 = arith.maximumf %13, %14 : vector<16x16xf32>
    %16 = math.sqrt %15 : vector<16x16xf32>
    %c0_4 = arith.constant 0 : index
    %c0_5 = arith.constant 0 : index
    %17 = vector.load %arg4[%c0_4, %c0_5] : memref<16x16xf32, #tpu.memory_space<vmem>>, vector<16x16xf32>
    tpu.vector_store %arg4[%c0_4, %c0_5], %16 {strides = array<i32>} : memref<16x16xf32, #tpu.memory_space<vmem>>, vector<16x16xf32>,
    %cst_6 = arith.constant dense<0xFF800000> : vector<16xf32>
    %18 = vector.multi_reduction <maximumf>, %16, %cst_6 [1] : vector<16x16xf32> to vector<16xf32>
    %19 = vector.shape_cast %18 : vector<16xf32> to vector<16x1xf32>
    %cst_7 = arith.constant dense<0xFF800000> : vector<1xf32>
    %20 = vector.multi_reduction <maximumf>, %19, %cst_7 [0] : vector<16x1xf32> to vector<1xf32>
    %21 = vector.shape_cast %20 : vector<1xf32> to vector<1x1xf32>
    %c0_8 = arith.constant 0 : index
    %c0_9 = arith.constant 0 : index
    %22 = vector.load %arg2[%c0_8, %c0_9] : memref<16x8xf32, #tpu.memory_space<vmem>>, vector<16x8xf32>
    %23 = arith.mulf %22, %22 : vector<16x8xf32>
    %cst_10 = arith.constant dense<0.000000e+00> : vector<16xf32>
    %24 = vector.multi_reduction <add>, %23, %cst_10 [1] : vector<16x8xf32> to vector<16xf32>
    %25 = vector.shape_cast %24 : vector<16xf32> to vector<16x1xf32>
    %cst_11 = arith.constant dense<0.000000e+00> : vector<16x16xf32>
    %26 = tpu.matmul %22, %22, %cst_11 {dimension_numbers = #tpu.dot_dimension_numbers<[1], [1], [0], [0], [0, 0, 1, 0], [], []>} : vector<16x8xf32>, vector<16x8xf32>, vector<16x16xf32> -> vector<16x16xf32>
    %27 = tpu.transpose %25, [1, 0] : vector<16x1xf32> -> vector<1x16xf32>
    %28 = vector.broadcast %25 : vector<16x1xf32> to vector<16x16xf32>
    %29 = vector.broadcast %27 : vector<1x16xf32> to vector<16x16xf32>
    %30 = arith.addf %28, %29 : vector<16x16xf32>
    %cst_12 = arith.constant 2.000000e+00 : f32
    %31 = vector.broadcast %cst_12 : f32 to vector<16x16xf32>
    %32 = arith.mulf %31, %26 : vector<16x16xf32>
    %33 = arith.subf %30, %32 : vector<16x16xf32>
    %cst_13 = arith.constant 0.000000e+00 : f32
    %34 = vector.broadcast %cst_13 : f32 to vector<16x16xf32>
    %35 = arith.maximumf %33, %34 : vector<16x16xf32>
    %36 = math.sqrt %35 : vector<16x16xf32>
    %c0_14 = arith.constant 0 : index
    %c0_15 = arith.constant 0 : index
    %37 = vector.load %arg5[%c0_14, %c0_15] : memref<16x16xf32, #tpu.memory_space<vmem>>, vector<16x16xf32>
    tpu.vector_store %arg5[%c0_14, %c0_15], %36 {strides = array<i32>} : memref<16x16xf32, #tpu.memory_space<vmem>>, vector<16x16xf32>,
    %cst_16 = arith.constant dense<0xFF800000> : vector<16xf32>
    %38 = vector.multi_reduction <maximumf>, %36, %cst_16 [1] : vector<16x16xf32> to vector<16xf32>
    %39 = vector.shape_cast %38 : vector<16xf32> to vector<16x1xf32>
    %cst_17 = arith.constant dense<0xFF800000> : vector<1xf32>
    %40 = vector.multi_reduction <maximumf>, %39, %cst_17 [0] : vector<16x1xf32> to vector<1xf32>
    %41 = vector.shape_cast %40 : vector<1xf32> to vector<1x1xf32>
    %cst_18 = arith.constant 1.000000e-30 : f32
    %42 = vector.broadcast %cst_18 : f32 to vector<1x1xf32>
    %43 = arith.maximumf %21, %42 : vector<1x1xf32>
    %cst_19 = arith.constant 1.000000e+00 : f32
    %44 = vector.broadcast %cst_19 : f32 to vector<1x1xf32>
    %45 = arith.divf %44, %43 : vector<1x1xf32>
    %cst_20 = arith.constant 1.000000e-30 : f32
    %46 = vector.broadcast %cst_20 : f32 to vector<1x1xf32>
    %47 = arith.maximumf %41, %46 : vector<1x1xf32>
    %cst_21 = arith.constant 1.000000e+00 : f32
    %48 = vector.broadcast %cst_21 : f32 to vector<1x1xf32>
    %49 = arith.divf %48, %47 : vector<1x1xf32>
    %cst_22 = arith.constant 0.000000e+00 : f32
    %50 = vector.broadcast %cst_22 : f32 to vector<1x16xf32>
    %51 = arith.cmpf oeq, %1, %50 : vector<1x16xf32>
    %c0_23 = arith.constant 0 : index
    %c0_24 = arith.constant 0 : index
    %52 = vector.load %arg4[%c0_23, %c0_24] : memref<16x16xf32, #tpu.memory_space<vmem>>, vector<1x16xf32>
    %cst_25 = arith.constant 1.000000e+30 : f32
    %53 = vector.broadcast %cst_25 : f32 to vector<1x16xf32>
    %54 = arith.select %51, %53, %52 : vector<1x16xi1>, vector<1x16xf32>
    %c0_26 = arith.constant 0 : index
    %c0_27 = arith.constant 0 : index
    %55 = vector.load %arg5[%c0_26, %c0_27] : memref<16x16xf32, #tpu.memory_space<vmem>>, vector<1x16xf32>
    %cst_28 = arith.constant 0.000000e+00 : f32
    %56 = vector.broadcast %cst_28 : f32 to vector<1x1xf32>
    %cst_29 = arith.constant 0.000000e+00 : f32
    %57 = vector.broadcast %cst_29 : f32 to vector<1x16xf32>
    %58 = arith.cmpf oeq, %1, %57 : vector<1x16xf32>
    %c0_30 = arith.constant 0 : index
    %c0_31 = arith.constant 0 : index
    %59 = vector.load %arg5[%c0_30, %c0_31] : memref<16x16xf32, #tpu.memory_space<vmem>>, vector<1x16xf32>
    %cst_32 = arith.constant 1.000000e+30 : f32
    %60 = vector.broadcast %cst_32 : f32 to vector<1x16xf32>
    %61 = arith.select %58, %60, %59 : vector<1x16xi1>, vector<1x16xf32>
    %c0_33 = arith.constant 0 : index
    %c0_34 = arith.constant 0 : index
    %62 = vector.load %arg4[%c0_33, %c0_34] : memref<16x16xf32, #tpu.memory_space<vmem>>, vector<1x16xf32>
    %cst_35 = arith.constant 0.000000e+00 : f32
    %63 = vector.broadcast %cst_35 : f32 to vector<1x1xf32>
    %c0_i32 = arith.constant 0 : i32
    %c15_i32 = arith.constant 15 : i32
    %64 = arith.addi %c0_i32, %c15_i32 : i32
    %c1_i32 = arith.constant 1 : i32
    %65:6 = scf.for %arg6 = %c0_i32 to %64 step %c1_i32 iter_args(%arg7 = %54, %arg8 = %55, %arg9 = %56, %arg10 = %61, %arg11 = %62, %arg12 = %63) -> (vector<1x16xf32>, vector<1x16xf32>, vector<1x1xf32>, vector<1x16xf32>, vector<1x16xf32>, vector<1x1xf32>)  : i32 {
      %cst_39 = arith.constant dense<0x7F800000> : vector<1xf32>
      %70 = vector.multi_reduction <minimumf>, %arg7, %cst_39 [1] : vector<1x16xf32> to vector<1xf32>
      %71 = vector.shape_cast %70 : vector<1xf32> to vector<1x1xf32>
      %72 = vector.broadcast %71 : vector<1x1xf32> to vector<1x16xf32>
      %73 = arith.cmpf oeq, %arg7, %72 : vector<1x16xf32>
      %cst_40 = arith.constant 1.600000e+01 : f32
      %74 = vector.broadcast %cst_40 : f32 to vector<1x16xf32>
      %75 = arith.select %73, %1, %74 : vector<1x16xi1>, vector<1x16xf32>
      %cst_41 = arith.constant dense<0x7F800000> : vector<1xf32>
      %76 = vector.multi_reduction <minimumf>, %75, %cst_41 [1] : vector<1x16xf32> to vector<1xf32>
      %77 = vector.shape_cast %76 : vector<1xf32> to vector<1x1xf32>
      %78 = vector.broadcast %77 : vector<1x1xf32> to vector<1x16xf32>
      %79 = arith.cmpf oeq, %1, %78 : vector<1x16xf32>
      %cst_42 = arith.constant 0.000000e+00 : f32
      %80 = vector.broadcast %cst_42 : f32 to vector<1x16xf32>
      %81 = arith.select %79, %arg8, %80 : vector<1x16xi1>, vector<1x16xf32>
      %cst_43 = arith.constant dense<0.000000e+00> : vector<1xf32>
      %82 = vector.multi_reduction <add>, %81, %cst_43 [1] : vector<1x16xf32> to vector<1xf32>
      %83 = vector.shape_cast %82 : vector<1xf32> to vector<1x1xf32>
      %84 = arith.mulf %71, %45 : vector<1x1xf32>
      %85 = arith.mulf %83, %49 : vector<1x1xf32>
      %86 = arith.subf %84, %85 : vector<1x1xf32>
      %87 = arith.mulf %86, %86 : vector<1x1xf32>
      %88 = arith.addf %arg9, %87 : vector<1x1xf32>
      %89 = vector.extract %77[0, 0] : f32 from vector<1x1xf32>
      %90 = arith.fptosi %89 : f32 to i32
      %cst_44 = arith.constant 1.000000e+30 : f32
      %91 = vector.broadcast %cst_44 : f32 to vector<1x16xf32>
      %92 = arith.select %79, %91, %arg7 : vector<1x16xi1>, vector<1x16xf32>
      %93 = arith.index_cast %90 : i32 to index
      %c0_45 = arith.constant 0 : index
      %94 = vector.load %arg4[%93, %c0_45] : memref<16x16xf32, #tpu.memory_space<vmem>>, vector<1x16xf32>
      %95 = arith.index_cast %90 : i32 to index
      %c0_46 = arith.constant 0 : index
      %96 = vector.load %arg5[%95, %c0_46] : memref<16x16xf32, #tpu.memory_space<vmem>>, vector<1x16xf32>
      %97 = arith.cmpf olt, %94, %92 : vector<1x16xf32>
      %cst_47 = arith.constant 1.000000e+30 : f32
      %98 = vector.broadcast %cst_47 : f32 to vector<1x16xf32>
      %99 = arith.cmpf olt, %92, %98 : vector<1x16xf32>
      %100 = arith.andi %97, %99 : vector<1x16xi1>
      %101 = arith.select %100, %94, %92 : vector<1x16xi1>, vector<1x16xf32>
      %102 = arith.select %100, %96, %arg8 : vector<1x16xi1>, vector<1x16xf32>
      %cst_48 = arith.constant dense<0x7F800000> : vector<1xf32>
      %103 = vector.multi_reduction <minimumf>, %arg10, %cst_48 [1] : vector<1x16xf32> to vector<1xf32>
      %104 = vector.shape_cast %103 : vector<1xf32> to vector<1x1xf32>
      %105 = vector.broadcast %104 : vector<1x1xf32> to vector<1x16xf32>
      %106 = arith.cmpf oeq, %arg10, %105 : vector<1x16xf32>
      %cst_49 = arith.constant 1.600000e+01 : f32
      %107 = vector.broadcast %cst_49 : f32 to vector<1x16xf32>
      %108 = arith.select %106, %1, %107 : vector<1x16xi1>, vector<1x16xf32>
      %cst_50 = arith.constant dense<0x7F800000> : vector<1xf32>
      %109 = vector.multi_reduction <minimumf>, %108, %cst_50 [1] : vector<1x16xf32> to vector<1xf32>
      %110 = vector.shape_cast %109 : vector<1xf32> to vector<1x1xf32>
      %111 = vector.broadcast %110 : vector<1x1xf32> to vector<1x16xf32>
      %112 = arith.cmpf oeq, %1, %111 : vector<1x16xf32>
      %cst_51 = arith.constant 0.000000e+00 : f32
      %113 = vector.broadcast %cst_51 : f32 to vector<1x16xf32>
      %114 = arith.select %112, %arg11, %113 : vector<1x16xi1>, vector<1x16xf32>
      %cst_52 = arith.constant dense<0.000000e+00> : vector<1xf32>
      %115 = vector.multi_reduction <add>, %114, %cst_52 [1] : vector<1x16xf32> to vector<1xf32>
      %116 = vector.shape_cast %115 : vector<1xf32> to vector<1x1xf32>
      %117 = arith.mulf %104, %49 : vector<1x1xf32>
      %118 = arith.mulf %116, %45 : vector<1x1xf32>
      %119 = arith.subf %117, %118 : vector<1x1xf32>
      %120 = arith.mulf %119, %119 : vector<1x1xf32>
      %121 = arith.addf %arg12, %120 : vector<1x1xf32>
      %122 = vector.extract %110[0, 0] : f32 from vector<1x1xf32>
      %123 = arith.fptosi %122 : f32 to i32
      %cst_53 = arith.constant 1.000000e+30 : f32
      %124 = vector.broadcast %cst_53 : f32 to vector<1x16xf32>
      %125 = arith.select %112, %124, %arg10 : vector<1x16xi1>, vector<1x16xf32>
      %126 = arith.index_cast %123 : i32 to index
      %c0_54 = arith.constant 0 : index
      %127 = vector.load %arg5[%126, %c0_54] : memref<16x16xf32, #tpu.memory_space<vmem>>, vector<1x16xf32>
      %128 = arith.index_cast %123 : i32 to index
      %c0_55 = arith.constant 0 : index
      %129 = vector.load %arg4[%128, %c0_55] : memref<16x16xf32, #tpu.memory_space<vmem>>, vector<1x16xf32>
      %130 = arith.cmpf olt, %127, %125 : vector<1x16xf32>
      %cst_56 = arith.constant 1.000000e+30 : f32
      %131 = vector.broadcast %cst_56 : f32 to vector<1x16xf32>
      %132 = arith.cmpf olt, %125, %131 : vector<1x16xf32>
      %133 = arith.andi %130, %132 : vector<1x16xi1>
      %134 = arith.select %133, %127, %125 : vector<1x16xi1>, vector<1x16xf32>
      %135 = arith.select %133, %129, %arg11 : vector<1x16xi1>, vector<1x16xf32>
      scf.yield %101, %102, %88, %134, %135, %121 : vector<1x16xf32>, vector<1x16xf32>, vector<1x1xf32>, vector<1x16xf32>, vector<1x16xf32>, vector<1x1xf32>
    }
    %66 = arith.addf %65#2, %65#5 : vector<1x1xf32>
    %cst_36 = arith.constant 5.000000e-01 : f32
    %67 = vector.broadcast %cst_36 : f32 to vector<1x1xf32>
    %68 = arith.mulf %67, %66 : vector<1x1xf32>
    %c0_37 = arith.constant 0 : index
    %c0_38 = arith.constant 0 : index
    %69 = vector.load %arg3[%c0_37, %c0_38] : memref<1x1xf32, #tpu.memory_space<vmem>>, vector<1x1xf32>
    tpu.vector_store %arg3[%c0_37, %c0_38], %68 {strides = array<i32>} : memref<1x1xf32, #tpu.memory_space<vmem>>, vector<1x1xf32>,
    return
  }
  func.func @transform_0(%arg0: i32) -> (i32, i32) {
    %c0_i32 = arith.constant 0 : i32
    %c0_i32_0 = arith.constant 0 : i32
    %c0_i32_1 = arith.constant 0 : i32
    return %c0_i32, %c0_i32_0 : i32, i32
  }
  func.func @transform_1(%arg0: i32) -> (i32, i32) {
    %c0_i32 = arith.constant 0 : i32
    %c0_i32_0 = arith.constant 0 : i32
    %c0_i32_1 = arith.constant 0 : i32
    return %c0_i32, %c0_i32_0 : i32, i32
  }
  func.func @transform_2(%arg0: i32) -> (i32, i32) {
    %c0_i32 = arith.constant 0 : i32
    %c0_i32_0 = arith.constant 0 : i32
    %c0_i32_1 = arith.constant 0 : i32
    return %c0_i32, %c0_i32_0 : i32, i32
  }
}

</mosaic_0001>

<llo_original>
// kernel: topological_autoencoder_loss.1
$region0: #{topological_autoencoder_loss.1}
  #allocation0 [shape = 'u32[]', space=smem, size = 0x4, offset = 0x4, fixed_abs, tag = 'smem constant byte address 0x4 - core index']
  #allocation1 [shape = 'u32[144,128]{1,0:T(1,128)}', space=vmem, size = 0x12000, scoped, tag = 'internal scratch']
  #allocation2 [shape = 'f32[16,16]{1,0:T(8,128)}', space=vmem, size = 0x2000, scoped, tag = 'scratch operand']
  #allocation3 [shape = 'f32[16,16]{1,0:T(8,128)}', space=vmem, size = 0x2000, scoped, tag = 'scratch operand']
  %s0 = inlined_call_operand.vmem [shape: f32[16,64], index: 0, kind: input, shape index: {}]
  %s1 = inlined_call_operand.vmem [shape: f32[16,8], index: 1, kind: input, shape index: {}]
  %s2 = inlined_call_operand.hbm [shape: f32[1,1], index: 2, kind: output, shape index: {}]
  %s3 = sld [smem:[#allocation0]]
  $region25: #{topological_autoencoder_loss.1} parent=0
    _
  %s5 = ssub.s32 1, %s3
  %s6 = scalar_select 0, %s5, %s3
  $region1: #{topological_autoencoder_loss.1} parent=0
    #allocation4 [shape = 'u8[512]{0}', space=vmem, size = 0x400, scoped, tag = 'output window, operand 0, single buffered']
    #allocation5 [shape = 's32[1]{0}', space=sflag, size = 0x4, scoped, tag = 'scoped memory for topological_autoencoder_loss.1']
    %7 = vsyncpa [#allocation5], 0
    // Predicated region
    $region2: #{topological_autoencoder_loss.1} parent=1 // pred_check
      _
    $region3: #{topological_autoencoder_loss.1} parent=1 // pred_check_branch
      %9 = sbr.rel (0) target = $region5
    $region4: #{topological_autoencoder_loss.1} parent=1 // pred_region
      _
    $region5: #{topological_autoencoder_loss.1} parent=1 // pred_fallthru
      _
    // Predicated region
    $region6: #{topological_autoencoder_loss.1} parent=1 // pred_check
      _
    $region7: #{topological_autoencoder_loss.1} parent=1 // pred_check_branch
      %11 = sbr.rel (0) target = $region9
    $region8: #{topological_autoencoder_loss.1} parent=1 // pred_region
      _
    $region9: #{topological_autoencoder_loss.1} parent=1 // pred_fallthru
      _
    %v12 = vlaneseq
    %v13 = vand.u32 %v12, 127
    %v14 = vcvt.s32.f32 %v13
    %v15 = vld [vmem:[%s0] sm:$0xff]
    %v16 = vld [vmem:[%s0 + $0x8] sm:$0xff]
    %v17 = vmul.f32 %v15, %v15
    %v18 = vmul.f32 %v16, %v16
    %vm19 = vcmask 523264
    %v20 = vsel %vm19, %v17, 0.0
    %21 = vadd.xlane.f32.xlu0 %v20
    %v22 = vpop.xlane.xlu0 %21
    %v23 = vsel %vm19, %v18, 0.0
    %24 = vadd.xlane.f32.xlu0 %v23
    %v25 = vpop.xlane.xlu0 %24
    %v27 = vsel %vm19, %v15, 0
    %v30 = vsel %vm19, %v16, 0
    %32 = vmatprep.subr.mxu0 0.0
    %33 = vmatpush1.xpose.msra.mxu0 %v27
    %34 = vmatprep.subr.mxu0 0.0
    %35 = vmatpush1.xpose.msra.mxu0 %v30
    %36 = vmatprep.subr.mxu0 0.0
    %37 = vmatpush1.xpose.msra.mxu0 0.0
    %38 = vmatprep.subr.mxu0 0.0
    %39 = vmatpush1.xpose.msra.mxu0 0.0
    %40 = vmatprep.subr.mxu0 0.0
    %41 = vmatpush1.xpose.msra.mxu0 0.0
    %42 = vmatprep.subr.mxu0 0.0
    %43 = vmatpush1.xpose.msra.mxu0 0.0
    %44 = vmatprep.subr.mxu0 0.0
    %45 = vmatpush1.xpose.msra.mxu0 0.0
    %46 = vmatprep.subr.mxu0 0.0
    %47 = vmatpush1.xpose.msra.mxu0 0.0
    %48 = vmatprep.subr.mxu0 0.0
    %49 = vmatpush1.xpose.msra.mxu0 0.0
    %50 = vmatprep.subr.mxu0 0.0
    %51 = vmatpush1.xpose.msra.mxu0 0.0
    %52 = vmatprep.subr.mxu0 0.0
    %53 = vmatpush1.xpose.msra.mxu0 0.0
    %54 = vmatprep.subr.mxu0 0.0
    %55 = vmatpush1.xpose.msra.mxu0 0.0
    %56 = vmatprep.subr.mxu0 0.0
    %57 = vmatpush1.xpose.msra.mxu0 0.0
    %58 = vmatprep.subr.mxu0 0.0
    %59 = vmatpush1.xpose.msra.mxu0 0.0
    %60 = vmatprep.subr.mxu0 0.0
    %61 = vmatpush1.xpose.msra.mxu0 0.0
    %62 = vmatprep.subr.mxu0 0.0
    %63 = vmatpush1.xpose.msra.mxu0 0.0
    %64 = vmatprep.subr.mxu0 0.0
    %65 = vmatpush1.xpose.msra.mxu0 0.0
    %66 = vmatprep.subr.mxu0 0.0
    %67 = vmatpush1.xpose.msra.mxu0 0.0
    %68 = vmatprep.subr.mxu0 0.0
    %69 = vmatpush1.xpose.msra.mxu0 0.0
    %70 = vmatprep.subr.mxu0 0.0
    %71 = vmatpush1.xpose.msra.mxu0 0.0
    %72 = vmatprep.subr.mxu0 0.0
    %73 = vmatpush1.xpose.msra.mxu0 0.0
    %74 = vmatprep.subr.mxu0 0.0
    %75 = vmatpush1.xpose.msra.mxu0 0.0
    %76 = vmatprep.subr.mxu0 0.0
    %77 = vmatpush1.xpose.msra.mxu0 0.0
    %78 = vmatprep.subr.mxu0 0.0
    %79 = vmatpush1.xpose.msra.mxu0 0.0
    %80 = vmatprep.subr.mxu0 0.0
    %81 = vmatpush1.xpose.msra.mxu0 0.0
    %82 = vmatprep.subr.mxu0 0.0
    %83 = vmatpush1.xpose.msra.mxu0 0.0
    %84 = vmatprep.subr.mxu0 0.0
    %85 = vmatpush1.xpose.msra.mxu0 0.0
    %86 = vmatprep.subr.mxu0 0.0
    %87 = vmatpush1.xpose.msra.mxu0 0.0
    %88 = vmatprep.subr.mxu0 0.0
    %89 = vmatpush1.xpose.msra.mxu0 0.0
    %90 = vmatprep.subr.mxu0 0.0
    %91 = vmatpush1.xpose.msra.mxu0 0.0
    %92 = vmatprep.subr.mxu0 0.0
    %93 = vmatpush1.xpose.msra.mxu0 0.0
    %94 = vmatprep.subr.mxu0 0.0
    %95 = vmatpush1.xpose.msra.mxu0 0.0
    %96 = vmatprep.mubr.f32.mxu0 0.0
    %97 = vmatmul.mubr.f32.gmra.mrb[0].mxu0 %v27
    %v98 = vpop.f32.mrb[0].mxu0
    %v99 = vadd.f32 0.0, %v98
    %v100 = vpop.f32.mrb[0].mxu0
    %101 = vmatprep.mubr.f32.mxu0 0.0
    %102 = vmatmul.mubr.f32.gmra.mrb[0].mxu0 %v30
    %v103 = vpop.f32.mrb[0].mxu0
    %v104 = vadd.f32 0.0, %v103
    %v105 = vpop.f32.mrb[0].mxu0
    %106 = vdwg.mxu0
    %107 = vxpose.xlu0.b32.start [1/16] %v22, 128
    %108 = vxpose.xlu0.b32.cont [2/16] %v25, 128
    %109 = vxpose.xlu0.b32.cont [3/16] 0.0, 128
    %110 = vxpose.xlu0.b32.cont [4/16] 0.0, 128
    %111 = vxpose.xlu0.b32.cont [5/16] 0.0, 128
    %112 = vxpose.xlu0.b32.cont [6/16] 0.0, 128
    %113 = vxpose.xlu0.b32.cont [7/16] 0.0, 128
    %114 = vxpose.xlu0.b32.cont [8/16] 0.0, 128
    %115 = vxpose.xlu0.b32.cont [9/16] 0.0, 128
    %116 = vxpose.xlu0.b32.cont [10/16] 0.0, 128
    %117 = vxpose.xlu0.b32.cont [11/16] 0.0, 128
    %118 = vxpose.xlu0.b32.cont [12/16] 0.0, 128
    %119 = vxpose.xlu0.b32.cont [13/16] 0.0, 128
    %120 = vxpose.xlu0.b32.cont [14/16] 0.0, 128
    %121 = vxpose.xlu0.b32.cont [15/16] 0.0, 128
    %122 = vxpose.xlu0.b32.end [16/16] 0.0, 128
    %v123 = vpop.trf.xlu0
    %v124 = vpop.trf.xlu0
    %v125 = vpop.trf.xlu0
    %v126 = vpop.trf.xlu0
    %v127 = vpop.trf.xlu0
    %v128 = vpop.trf.xlu0
    %v129 = vpop.trf.xlu0
    %v130 = vpop.trf.xlu0
    %v131 = vpop.trf.xlu0
    %v132 = vpop.trf.xlu0
    %v133 = vpop.trf.xlu0
    %v134 = vpop.trf.xlu0
    %v135 = vpop.trf.xlu0
    %v136 = vpop.trf.xlu0
    %v137 = vpop.trf.xlu0
    %v138 = vpop.trf.xlu0
    %v139 = vlaneseq
    %v140 = vshrl.u32 %v139, 7
    %v141 = vsub.s32 0, %v140
    %v142 = vrot.slane %v123, %v141
    %v143 = vadd.f32 %v22, %v142
    %v144 = vadd.f32 %v25, %v142
    %v145 = vmul.f32 %v99, 2.0
    %v146 = vmul.f32 %v104, 2.0
    %v147 = vsub.f32 %v143, %v145
    %v148 = vsub.f32 %v144, %v146
    %v149 = vmax.f32 %v147, 0.0
    %v150 = vmax.f32 %v148, 0.0
    %v151 = vrsqrt.pop %v149
    %v152 = vmul.f32 %v149, %v151
    %vm153 = vcmp.eq.f32.partialorder %v149, inf
    %v154 = vsel %vm153, %v149, %v152
    %vm155 = vcmp.eq.f32.partialorder %v149, 0.0
    %v156 = vand.u32 %v149, 2147483648
    %v157 = vsel %vm155, %v156, %v154
    %v158 = vrsqrt.pop %v150
    %v159 = vmul.f32 %v150, %v158
    %vm160 = vcmp.eq.f32.partialorder %v150, inf
    %v161 = vsel %vm160, %v150, %v159
    %vm162 = vcmp.eq.f32.partialorder %v150, 0.0
    %v163 = vand.u32 %v150, 2147483648
    %v164 = vsel %vm162, %v163, %v161
    %vm165 = vcmask 130048
    %166 = vst.msk [vmem:[#allocation2] sm:$0xff] %vm165, %v157
    %167 = vst.msk [vmem:[#allocation2 + $0x8] sm:$0xff] %vm165, %v164
    %v168 = vsel %vm165, %v157, -inf
    %169 = vmax.xlane.f32.xlu0 %v168
    %v170 = vpop.xlane.xlu0 %169
    %v171 = vsel %vm165, %v164, -inf
    %172 = vmax.xlane.f32.xlu0 %v171
    %v173 = vpop.xlane.xlu0 %172
    %v174 = vmax.f32 %v170, %v173
    %v175 = vrot.slane %v174, 4
    %v176 = vmax.f32 %v174, %v175
    %v177 = vrot.slane %v176, 2
    %v178 = vmax.f32 %v176, %v177
    %v179 = vrot.slane %v178, 1
    %v180 = vmax.f32 %v178, %v179
    %v181 = vld [vmem:[%s1] sm:$0xff]
    %v182 = vld [vmem:[%s1 + $0x8] sm:$0xff]
    %v183 = vmul.f32 %v181, %v181
    %v184 = vmul.f32 %v182, %v182
    %vm185 = vcmask 64512
    %v186 = vsel %vm185, %v183, 0.0
    %187 = vadd.xlane.f32.xlu0 %v186
    %v188 = vpop.xlane.xlu0 %187
    %v189 = vsel %vm185, %v184, 0.0
    %190 = vadd.xlane.f32.xlu0 %v189
    %v191 = vpop.xlane.xlu0 %190
    %v193 = vsel %vm185, %v181, 0
    %v196 = vsel %vm185, %v182, 0
    %198 = vmatprep.subr.mxu0 0.0
    %199 = vmatpush1.xpose.msra.mxu0 %v193
    %200 = vmatprep.subr.mxu0 0.0
    %201 = vmatpush1.xpose.msra.mxu0 %v196
    %202 = vmatprep.subr.mxu0 0.0
    %203 = vmatpush1.xpose.msra.mxu0 0.0
    %204 = vmatprep.subr.mxu0 0.0
    %205 = vmatpush1.xpose.msra.mxu0 0.0
    %206 = vmatprep.subr.mxu0 0.0
    %207 = vmatpush1.xpose.msra.mxu0 0.0
    %208 = vmatprep.subr.mxu0 0.0
    %209 = vmatpush1.xpose.msra.mxu0 0.0
    %210 = vmatprep.subr.mxu0 0.0
    %211 = vmatpush1.xpose.msra.mxu0 0.0
    %212 = vmatprep.subr.mxu0 0.0
    %213 = vmatpush1.xpose.msra.mxu0 0.0
    %214 = vmatprep.subr.mxu0 0.0
    %215 = vmatpush1.xpose.msra.mxu0 0.0
    %216 = vmatprep.subr.mxu0 0.0
    %217 = vmatpush1.xpose.msra.mxu0 0.0
    %218 = vmatprep.subr.mxu0 0.0
    %219 = vmatpush1.xpose.msra.mxu0 0.0
    %220 = vmatprep.subr.mxu0 0.0
    %221 = vmatpush1.xpose.msra.mxu0 0.0
    %222 = vmatprep.subr.mxu0 0.0
    %223 = vmatpush1.xpose.msra.mxu0 0.0
    %224 = vmatprep.subr.mxu0 0.0
    %225 = vmatpush1.xpose.msra.mxu0 0.0
    %226 = vmatprep.subr.mxu0 0.0
    %227 = vmatpush1.xpose.msra.mxu0 0.0
    %228 = vmatprep.subr.mxu0 0.0
    %229 = vmatpush1.xpose.msra.mxu0 0.0
    %230 = vmatprep.subr.mxu0 0.0
    %231 = vmatpush1.xpose.msra.mxu0 0.0
    %232 = vmatprep.subr.mxu0 0.0
    %233 = vmatpush1.xpose.msra.mxu0 0.0
    %234 = vmatprep.subr.mxu0 0.0
    %235 = vmatpush1.xpose.msra.mxu0 0.0
    %236 = vmatprep.subr.mxu0 0.0
    %237 = vmatpush1.xpose.msra.mxu0 0.0
    %238 = vmatprep.subr.mxu0 0.0
    %239 = vmatpush1.xpose.msra.mxu0 0.0
    %240 = vmatprep.subr.mxu0 0.0
    %241 = vmatpush1.xpose.msra.mxu0 0.0
    %242 = vmatprep.subr.mxu0 0.0
    %243 = vmatpush1.xpose.msra.mxu0 0.0
    %244 = vmatprep.subr.mxu0 0.0
    %245 = vmatpush1.xpose.msra.mxu0 0.0
    %246 = vmatprep.subr.mxu0 0.0
    %247 = vmatpush1.xpose.msra.mxu0 0.0
    %248 = vmatprep.subr.mxu0 0.0
    %249 = vmatpush1.xpose.msra.mxu0 0.0
    %250 = vmatprep.subr.mxu0 0.0
    %251 = vmatpush1.xpose.msra.mxu0 0.0
    %252 = vmatprep.subr.mxu0 0.0
    %253 = vmatpush1.xpose.msra.mxu0 0.0
    %254 = vmatprep.subr.mxu0 0.0
    %255 = vmatpush1.xpose.msra.mxu0 0.0
    %256 = vmatprep.subr.mxu0 0.0
    %257 = vmatpush1.xpose.msra.mxu0 0.0
    %258 = vmatprep.subr.mxu0 0.0
    %259 = vmatpush1.xpose.msra.mxu0 0.0
    %260 = vmatprep.subr.mxu0 0.0
    %261 = vmatpush1.xpose.msra.mxu0 0.0
    %262 = vmatprep.mubr.f32.mxu0 0.0
    %263 = vmatmul.mubr.f32.gmra.mrb[0].mxu0 %v193
    %v264 = vpop.f32.mrb[0].mxu0
    %v265 = vadd.f32 0.0, %v264
    %v266 = vpop.f32.mrb[0].mxu0
    %267 = vmatprep.mubr.f32.mxu0 0.0
    %268 = vmatmul.mubr.f32.gmra.mrb[0].mxu0 %v196
    %v269 = vpop.f32.mrb[0].mxu0
    %v270 = vadd.f32 0.0, %v269
    %v271 = vpop.f32.mrb[0].mxu0
    %272 = vdwg.mxu0
    %273 = vxpose.xlu0.b32.start [1/16] %v188, 128
    %274 = vxpose.xlu0.b32.cont [2/16] %v191, 128
    %275 = vxpose.xlu0.b32.cont [3/16] 0.0, 128
    %276 = vxpose.xlu0.b32.cont [4/16] 0.0, 128
    %277 = vxpose.xlu0.b32.cont [5/16] 0.0, 128
    %278 = vxpose.xlu0.b32.cont [6/16] 0.0, 128
    %279 = vxpose.xlu0.b32.cont [7/16] 0.0, 128
    %280 = vxpose.xlu0.b32.cont [8/16] 0.0, 128
    %281 = vxpose.xlu0.b32.cont [9/16] 0.0, 128
    %282 = vxpose.xlu0.b32.cont [10/16] 0.0, 128
    %283 = vxpose.xlu0.b32.cont [11/16] 0.0, 128
    %284 = vxpose.xlu0.b32.cont [12/16] 0.0, 128
    %285 = vxpose.xlu0.b32.cont [13/16] 0.0, 128
    %286 = vxpose.xlu0.b32.cont [14/16] 0.0, 128
    %287 = vxpose.xlu0.b32.cont [15/16] 0.0, 128
    %288 = vxpose.xlu0.b32.end [16/16] 0.0, 128
    %v289 = vpop.trf.xlu0
    %v290 = vpop.trf.xlu0
    %v291 = vpop.trf.xlu0
    %v292 = vpop.trf.xlu0
    %v293 = vpop.trf.xlu0
    %v294 = vpop.trf.xlu0
    %v295 = vpop.trf.xlu0
    %v296 = vpop.trf.xlu0
    %v297 = vpop.trf.xlu0
    %v298 = vpop.trf.xlu0
    %v299 = vpop.trf.xlu0
    %v300 = vpop.trf.xlu0
    %v301 = vpop.trf.xlu0
    %v302 = vpop.trf.xlu0
    %v303 = vpop.trf.xlu0
    %v304 = vpop.trf.xlu0
    %v305 = vlaneseq
    %v306 = vshrl.u32 %v305, 7
    %v307 = vsub.s32 0, %v306
    %v308 = vrot.slane %v289, %v307
    %v309 = vadd.f32 %v188, %v308
    %v310 = vadd.f32 %v191, %v308
    %v311 = vmul.f32 %v265, 2.0
    %v312 = vmul.f32 %v270, 2.0
    %v313 = vsub.f32 %v309, %v311
    %v314 = vsub.f32 %v310, %v312
    %v315 = vmax.f32 %v313, 0.0
    %v316 = vmax.f32 %v314, 0.0
    %v317 = vrsqrt.pop %v315
    %v318 = vmul.f32 %v315, %v317
    %vm319 = vcmp.eq.f32.partialorder %v315, inf
    %v320 = vsel %vm319, %v315, %v318
    %vm321 = vcmp.eq.f32.partialorder %v315, 0.0
    %v322 = vand.u32 %v315, 2147483648
    %v323 = vsel %vm321, %v322, %v320
    %v324 = vrsqrt.pop %v316
    %v325 = vmul.f32 %v316, %v324
    %vm326 = vcmp.eq.f32.partialorder %v316, inf
    %v327 = vsel %vm326, %v316, %v325
    %vm328 = vcmp.eq.f32.partialorder %v316, 0.0
    %v329 = vand.u32 %v316, 2147483648
    %v330 = vsel %vm328, %v329, %v327
    %331 = vst.msk [vmem:[#allocation3] sm:$0xff] %vm165, %v323
    %332 = vst.msk [vmem:[#allocation3 + $0x8] sm:$0xff] %vm165, %v330
    %v333 = vsel %vm165, %v323, -inf
    %334 = vmax.xlane.f32.xlu0 %v333
    %v335 = vpop.xlane.xlu0 %334
    %v336 = vsel %vm165, %v330, -inf
    %337 = vmax.xlane.f32.xlu0 %v336
    %v338 = vpop.xlane.xlu0 %337
    %v339 = vmax.f32 %v335, %v338
    %v340 = vrot.slane %v339, 4
    %v341 = vmax.f32 %v339, %v340
    %v342 = vrot.slane %v341, 2
    %v343 = vmax.f32 %v341, %v342
    %v344 = vrot.slane %v343, 1
    %v345 = vmax.f32 %v343, %v344
    %v346 = vmax.f32 %v180, 1e-30
    %v347 = vrcp.pop %v346
    %v348 = vmul.f32 1.0, %v347
    %v349 = vmax.f32 %v345, 1e-30
    %v350 = vrcp.pop %v349
    %v351 = vmul.f32 1.0, %v350
    %vm352 = vcmp.eq.f32.partialorder %v14, 0.0
    %v353 = vld [vmem:[#allocation2] sm:$0x1]
    %v354 = vsel %vm352, 1e+30, %v353
    %v355 = vld [vmem:[#allocation3] sm:$0x1]
    %v356 = vsel %vm352, 1e+30, %v355
    loop: start=0, step=1, limit=15
    $region10: #{topological_autoencoder_loss.1} parent=1 // loop_pre_header
      _
    $region11: #{topological_autoencoder_loss.1} parent=1 // loop_header
      %s358 = sphi 0, %s362
      %p359 = scmp.ge.s32.totalorder %s358, 15
      %v363 = vphi %v354, %v398
      %v364 = vphi %v355, %v399
      %v365 = vphi 0.0, %v387
      %v366 = vphi %v356, %v428
      %v367 = vphi %v353, %v429
      %v368 = vphi 0.0, %v417
    $region12: #{topological_autoencoder_loss.1} parent=1 // loop_header_branch
      %361 = sbr.rel (%p359) target = $region16
    $region13: #{topological_autoencoder_loss.1} parent=1 // loop_body
      %vm369 = vcmask 122880
      %v370 = vsel %vm369, %v363, inf
      %371 = vmin.xlane.f32.xlu0 %v370
      %v372 = vpop.xlane.xlu0 %371
      %vm373 = vcmp.eq.f32.partialorder %v363, %v372
      %v374 = vsel %vm373, %v14, 16.0
      %v375 = vsel %vm369, %v374, inf
      %376 = vmin.xlane.f32.xlu0 %v375
      %v377 = vpop.xlane.xlu0 %376
      %vm378 = vcmp.eq.f32.partialorder %v14, %v377
      %v379 = vsel %vm378, %v364, 0.0
      %v380 = vsel %vm369, %v379, 0.0
      %381 = vadd.xlane.f32.xlu0 %v380
      %v382 = vpop.xlane.xlu0 %381
      %v383 = vmul.f32 %v372, %v348
      %v384 = vmul.f32 %v382, %v351
      %v385 = vsub.f32 %v383, %v384
      %v386 = vmul.f32 %v385, %v385
      %v387 = vadd.f32 %v365, %v386
      %s388 = vtos %v377
      %s389 = scvt.f32.s32.to.zero.pseudo %s388
      %v390 = vsel %vm378, 1e+30, %v363
      %s391 = scalar_lea.vmem [#allocation2], %s389
      %v392 = vld [vmem:[%s391] sm:$0x1]
      %s393 = scalar_lea.vmem [#allocation3], %s389
      %v394 = vld [vmem:[%s393] sm:$0x1]
      %vm395 = vcmp.lt.f32.partialorder %v392, %v390
      %vm396 = vcmp.lt.f32.partialorder %v390, 1e+30
      %vm397 = vmand %vm395, %vm396
      %v398 = vsel %vm397, %v392, %v390
      %v399 = vsel %vm397, %v394, %v364
      %v400 = vsel %vm369, %v366, inf
      %401 = vmin.xlane.f32.xlu0 %v400
      %v402 = vpop.xlane.xlu0 %401
      %vm403 = vcmp.eq.f32.partialorder %v366, %v402
      %v404 = vsel %vm403, %v14, 16.0
      %v405 = vsel %vm369, %v404, inf
      %406 = vmin.xlane.f32.xlu0 %v405
      %v407 = vpop.xlane.xlu0 %406
      %vm408 = vcmp.eq.f32.partialorder %v14, %v407
      %v409 = vsel %vm408, %v367, 0.0
      %v410 = vsel %vm369, %v409, 0.0
      %411 = vadd.xlane.f32.xlu0 %v410
      %v412 = vpop.xlane.xlu0 %411
      %v413 = vmul.f32 %v402, %v351
      %v414 = vmul.f32 %v412, %v348
      %v415 = vsub.f32 %v413, %v414
      %v416 = vmul.f32 %v415, %v415
      %v417 = vadd.f32 %v368, %v416
      %s418 = vtos %v407
      %s419 = scvt.f32.s32.to.zero.pseudo %s418
      %v420 = vsel %vm408, 1e+30, %v366
      %s421 = scalar_lea.vmem [#allocation3], %s419
      %v422 = vld [vmem:[%s421] sm:$0x1]
      %s423 = scalar_lea.vmem [#allocation2], %s419
      %v424 = vld [vmem:[%s423] sm:$0x1]
      %vm425 = vcmp.lt.f32.partialorder %v422, %v420
      %vm426 = vcmp.lt.f32.partialorder %v420, 1e+30
      %vm427 = vmand %vm425, %vm426
      %v428 = vsel %vm427, %v422, %v420
      %v429 = vsel %vm427, %v424, %v367
    $region14: #{topological_autoencoder_loss.1} parent=1 // loop_footer
      %s362 = sadd.s32 1, %s358
    $region15: #{topological_autoencoder_loss.1} parent=1 // loop_footer_branch
      %357 = sbr.rel target = $region11
    $region16: #{topological_autoencoder_loss.1} parent=1 // loop_exit
      _
    %v430 = vadd.f32 %v365, %v368
    %v431 = vmul.f32 %v430, 0.5
    %vm432 = vcmask 0
    %433 = vst.msk [vmem:[#allocation4] sm:$0x1] %vm432, %v431
    // Predicated region
    $region17: #{topological_autoencoder_loss.1} parent=1 // pred_check
      _
    $region18: #{topological_autoencoder_loss.1} parent=1 // pred_check_branch
      %435 = sbr.rel (0) target = $region20
    $region19: #{topological_autoencoder_loss.1} parent=1 // pred_region
      %s437 = ssub.s32 16, 16
      %438 = vsyncadd [#allocation5], %s437
      %s440 = sshll.u32 [#allocation4], 4
      %s441 = int_to_ptr.vmem [resolvable:$true] %s440
      %443 = dma.vmem_to_hbm [thread:$0]  %s441, 16, %s2, [#allocation5]
    $region20: #{topological_autoencoder_loss.1} parent=1 // pred_fallthru
      _
    // Predicated region
    $region21: #{topological_autoencoder_loss.1} parent=1 // pred_check
      _
    $region22: #{topological_autoencoder_loss.1} parent=1 // pred_check_branch
      %445 = sbr.rel (0) target = $region24
    $region23: #{topological_autoencoder_loss.1} parent=1 // pred_region
      %446 = dma.done [#allocation5], 16
    $region24: #{topological_autoencoder_loss.1} parent=1 // pred_fallthru
      _
    %447 = vsyncpa [#allocation5], 1

</llo_original>
